<compile_context>
chip_gen: v5e
topology: v5e:2x2
jax: 0.10.0
libtpu: 0.0.40
codegen_flags: <defaults>
</compile_context>

<pallas_src>
import jax
import jax.numpy as jnp
from jax.experimental import pallas as pl
from jax.experimental.pallas import tpu as pltpu

_LANE = 128
_NEG_LARGE = -1.0e30  # finite "-inf" for padded action logits (exp -> 0.0 exactly)


def _round_up(n, m):
    return ((n + m - 1) // m) * m


def _pick_tile_b(batch, state_size, f_pad, a_pad, vmem_budget=24 * 1024 * 1024):
    """Largest batch tile whose double-buffered x/out tiles + resident weights +
    in-kernel f32 activations fit a conservative VMEM budget (sized for v7x's
    smaller 64 MiB VMEM / ~32 MiB default scoped limit, not v5e/v6e's 128 MiB)."""
    resident = (state_size * f_pad + f_pad * a_pad) * 2 + (f_pad + a_pad) * 4
    for t in (1024, 512, 256, 128, 64, 32, 16, 8):
        if batch % t != 0:
            continue
        per_step = 2 * (t * state_size * 2 + t * a_pad * 4)  # double-buffered x(bf16)+out(f32)
        per_step += t * f_pad * 4 + t * a_pad * 4             # f32 hidden + logits in-kernel
        if resident + per_step <= vmem_budget:
            return t
    return batch  # tiny batch: single block (block_shape == full array dim is allowed)


def _mlp_kernel(x_ref, w1_ref, b1_ref, w2_ref, b2_ref, o_ref):
    # x_ref: (TB, S) bf16 | w1_ref: (S, Fp) bf16 | b1_ref: (1, Fp) f32
    # w2_ref: (Fp, Ap) bf16 | b2_ref: (1, Ap) f32 | o_ref: (TB, Ap) f32
    # Hidden layer: bf16 MXU matmul, f32 accumulate, f32 bias + ReLU on the VPU.
    h = jnp.dot(x_ref[...], w1_ref[...], preferred_element_type=jnp.float32)
    h = jnp.maximum(h + b1_ref[...], 0.0)
    # Output layer: cast activations back to bf16 only for the MXU operand.
    logits = jnp.dot(h.astype(w2_ref.dtype), w2_ref[...],
                     preferred_element_type=jnp.float32) + b2_ref[...]
    # Softmax over the (padded) action axis; padded lanes carry -1e30 bias -> exp == 0.
    m = jnp.max(logits, axis=-1, keepdims=True)
    e = jnp.exp(logits - m)
    denom = jnp.sum(e, axis=-1, keepdims=True)
    # approx=False keeps full f32 accuracy (approx=True would break 1e-5 tolerance).
    o_ref[...] = (e * pl.reciprocal(denom, approx=False)).astype(o_ref.dtype)


def prepare_params(w1, b1, w2, b2):
    """One-time parameter prep (do NOT redo per call): transpose to x @ W layout,
    zero-pad hidden/action dims to lane multiples, cast MXU operands to bf16."""
    fc_units, state_size = w1.shape
    action_size = w2.shape[0]
    f_pad = _round_up(fc_units, _LANE)
    a_pad = _round_up(action_size, _LANE)

    w1_t = jnp.zeros((state_size, f_pad), jnp.bfloat16)
    w1_t = w1_t.at[:, :fc_units].set(w1.T.astype(jnp.bfloat16))
    b1_p = jnp.zeros((1, f_pad), jnp.float32).at[:, :fc_units].set(b1)

    w2_t = jnp.zeros((f_pad, a_pad), jnp.bfloat16)
    w2_t = w2_t.at[:fc_units, :action_size].set(w2.T.astype(jnp.bfloat16))
    b2_p = jnp.full((1, a_pad), _NEG_LARGE, jnp.float32).at[:, :action_size].set(b2)

    return w1_t, b1_p, w2_t, b2_p, action_size


def single_hidden_layer_forward(x, w1_t, b1_p, w2_t, b2_p, action_size):
    """x: (B, S) f32; prepared params from prepare_params() -> (B, A) softmax probs."""
    batch, state_size = x.shape
    f_pad = w1_t.shape[1]
    a_pad = w2_t.shape[1]
    tile_b = _pick_tile_b(batch, state_size, f_pad, a_pad)
    grid = (batch // tile_b,)

    flops = 2 * batch * (state_size * f_pad + f_pad * a_pad)
    bytes_accessed = (batch * state_size * 2          # x (bf16)
                      + w1_t.size * 2 + w2_t.size * 2  # weights (bf16)
                      + b1_p.size * 4 + b2_p.size * 4  # biases (f32)
                      + batch * a_pad * 4)             # output (f32)

    out = pl.pallas_call(
        _mlp_kernel,
        out_shape=jax.ShapeDtypeStruct((batch, a_pad), jnp.float32),
        grid=grid,
        in_specs=[
            pl.BlockSpec((tile_b, state_size), lambda i: (i, 0)),   # x: tiled over batch
            pl.BlockSpec((state_size, f_pad), lambda i: (0, 0)),    # W1: resident
            pl.BlockSpec((1, f_pad), lambda i: (0, 0)),             # b1: resident
            pl.BlockSpec((f_pad, a_pad), lambda i: (0, 0)),         # W2: resident
            pl.BlockSpec((1, a_pad), lambda i: (0, 0)),             # b2: resident
        ],
        out_specs=pl.BlockSpec((tile_b, a_pad), lambda i: (i, 0)),  # lane-dense (Ap=128k)
        compiler_params=pltpu.CompilerParams(
            dimension_semantics=("parallel",)),                     # v7x: split batch over 2 TCs
        cost_estimate=pl.CostEstimate(
            flops=flops, transcendentals=batch * a_pad, bytes_accessed=bytes_accessed),
    )(x.astype(jnp.bfloat16), w1_t, b1_p, w2_t, b2_p)

    return out[:, :action_size]  # drop the lane padding outside the kernel


def init_params(key, state_size, fc_units, action_size):
    """Deterministic init mimicking torch.nn.Linear default (U[-1/sqrt(fan_in), +])."""
    k1, k2, k3, k4 = jax.random.split(key, 4)
    bound1 = 1.0 / jnp.sqrt(jnp.float32(state_size))
    bound2 = 1.0 / jnp.sqrt(jnp.float32(fc_units))
    w1 = jax.random.uniform(k1, (fc_units, state_size), jnp.float32, -bound1, bound1)
    b1 = jax.random.uniform(k2, (fc_units,), jnp.float32, -bound1, bound1)
    w2 = jax.random.uniform(k3, (action_size, fc_units), jnp.float32, -bound2, bound2)
    b2 = jax.random.uniform(k4, (action_size,), jnp.float32, -bound2, bound2)
    return w1, b1, w2, b2


if __name__ == "__main__":
    # Small shapes implied by the module: batch of states -> action probabilities.
    batch, state_size, fc_units, action_size = 8, 16, 32, 4

    key = jax.random.PRNGKey(0)
    kx, kp = jax.random.split(key)
    x = jax.random.normal(kx, (batch, state_size), jnp.float32)
    w1, b1, w2, b2 = init_params(kp, state_size, fc_units, action_size)

    # One-time prep (transpose / pad / bf16 cast), then the per-call kernel.
    params = prepare_params(w1, b1, w2, b2)
    probs = single_hidden_layer_forward(x, *params)
    probs = jax.block_until_ready(probs)

    # Reference that mirrors the kernel's bf16-operand / f32-accumulate math.
    xb = x.astype(jnp.bfloat16)
    h = jnp.dot(xb, w1.T.astype(jnp.bfloat16), preferred_element_type=jnp.float32) + b1
    h = jnp.maximum(h, 0.0).astype(jnp.bfloat16)
    logits = jnp.dot(h, w2.T.astype(jnp.bfloat16), preferred_element_type=jnp.float32) + b2
    ref = jax.nn.softmax(logits, axis=1)

    # Full-f32 module reference (semantics sanity check; bf16 MXU operands add ~1e-3 rel error).
    ref_f32 = jax.nn.softmax(jnp.maximum(x @ w1.T + b1, 0.0) @ w2.T + b2, axis=1)

    assert probs.shape == (batch, action_size)
    assert jnp.allclose(jnp.sum(probs, axis=1), 1.0, atol=1e-5)
    assert jnp.allclose(probs, ref, atol=1e-5, rtol=1e-5)
    assert jnp.allclose(probs, ref_f32, atol=2e-2)
    print("KERNEL_OK")
</pallas_src>

<mosaic_0001>
module attributes {stable_mosaic.version = 11 : i64} {
  func.func @_mlp_kernel(%arg0: i32, %arg1: memref<8x16xbf16, #tpu.memory_space<vmem>>, %arg2: memref<16x128xbf16, #tpu.memory_space<vmem>>, %arg3: memref<1x128xf32, #tpu.memory_space<vmem>>, %arg4: memref<128x128xbf16, #tpu.memory_space<vmem>>, %arg5: memref<1x128xf32, #tpu.memory_space<vmem>>, %arg6: memref<8x128xf32, #tpu.memory_space<vmem>>) attributes {dimension_semantics = [#tpu.dimension_semantics<parallel>], iteration_bounds = array<i64: 1>, scalar_prefetch = 0 : i64, scratch_operands = 0 : i64, tpu.core_type = #tpu.core_type<tc>, window_params = [{transform_indices = @transform_0, window_bounds = array<i64: 8, 16>}, {pipeline_mode = #tpu.pipeline_mode<synchronous>, transform_indices = @transform_1, window_bounds = array<i64: 16, 128>}, {pipeline_mode = #tpu.pipeline_mode<synchronous>, transform_indices = @transform_2, window_bounds = array<i64: 1, 128>}, {pipeline_mode = #tpu.pipeline_mode<synchronous>, transform_indices = @transform_3, window_bounds = array<i64: 128, 128>}, {pipeline_mode = #tpu.pipeline_mode<synchronous>, transform_indices = @transform_4, window_bounds = array<i64: 1, 128>}, {transform_indices = @transform_5, window_bounds = array<i64: 8, 128>}]} {
    %c0 = arith.constant 0 : index
    %c0_0 = arith.constant 0 : index
    %0 = vector.load %arg1[%c0, %c0_0] : memref<8x16xbf16, #tpu.memory_space<vmem>>, vector<8x16xbf16>
    %c0_1 = arith.constant 0 : index
    %c0_2 = arith.constant 0 : index
    %1 = vector.load %arg2[%c0_1, %c0_2] : memref<16x128xbf16, #tpu.memory_space<vmem>>, vector<16x128xbf16>
    %cst = arith.constant dense<0.000000e+00> : vector<8x128xf32>
    %2 = tpu.matmul %0, %1, %cst {dimension_numbers = #tpu.dot_dimension_numbers<[1], [0], [0], [1], [0, 0, 1, 1], [], []>} : vector<8x16xbf16>, vector<16x128xbf16>, vector<8x128xf32> -> vector<8x128xf32>
    %c0_3 = arith.constant 0 : index
    %c0_4 = arith.constant 0 : index
    %3 = vector.load %arg3[%c0_3, %c0_4] : memref<1x128xf32, #tpu.memory_space<vmem>>, vector<1x128xf32>
    %4 = vector.broadcast %3 : vector<1x128xf32> to vector<8x128xf32>
    %5 = arith.addf %2, %4 : vector<8x128xf32>
    %cst_5 = arith.constant 0.000000e+00 : f32
    %6 = vector.broadcast %cst_5 : f32 to vector<8x128xf32>
    %7 = arith.maximumf %5, %6 : vector<8x128xf32>
    %8 = arith.truncf %7 : vector<8x128xf32> to vector<8x128xbf16>
    %c0_6 = arith.constant 0 : index
    %c0_7 = arith.constant 0 : index
    %9 = vector.load %arg4[%c0_6, %c0_7] : memref<128x128xbf16, #tpu.memory_space<vmem>>, vector<128x128xbf16>
    %cst_8 = arith.constant dense<0.000000e+00> : vector<8x128xf32>
    %10 = tpu.matmul %8, %9, %cst_8 {dimension_numbers = #tpu.dot_dimension_numbers<[1], [0], [0], [1], [0, 0, 1, 1], [], []>} : vector<8x128xbf16>, vector<128x128xbf16>, vector<8x128xf32> -> vector<8x128xf32>
    %c0_9 = arith.constant 0 : index
    %c0_10 = arith.constant 0 : index
    %11 = vector.load %arg5[%c0_9, %c0_10] : memref<1x128xf32, #tpu.memory_space<vmem>>, vector<1x128xf32>
    %12 = vector.broadcast %11 : vector<1x128xf32> to vector<8x128xf32>
    %13 = arith.addf %10, %12 : vector<8x128xf32>
    %cst_11 = arith.constant dense<0xFF800000> : vector<8xf32>
    %14 = vector.multi_reduction <maximumf>, %13, %cst_11 [1] : vector<8x128xf32> to vector<8xf32>
    %15 = vector.shape_cast %14 : vector<8xf32> to vector<8x1xf32>
    %16 = vector.broadcast %15 : vector<8x1xf32> to vector<8x128xf32>
    %17 = arith.subf %13, %16 : vector<8x128xf32>
    %18 = math.exp %17 : vector<8x128xf32>
    %cst_12 = arith.constant dense<0.000000e+00> : vector<8xf32>
    %19 = vector.multi_reduction <add>, %18, %cst_12 [1] : vector<8x128xf32> to vector<8xf32>
    %20 = vector.shape_cast %19 : vector<8xf32> to vector<8x1xf32>
    %21 = tpu.reciprocal %20 : vector<8x1xf32> -> vector<8x1xf32>
    %22 = vector.broadcast %21 : vector<8x1xf32> to vector<8x128xf32>
    %23 = arith.mulf %18, %22 : vector<8x128xf32>
    %c0_13 = arith.constant 0 : index
    %c0_14 = arith.constant 0 : index
    %24 = vector.load %arg6[%c0_13, %c0_14] : memref<8x128xf32, #tpu.memory_space<vmem>>, vector<8x128xf32>
    tpu.vector_store %arg6[%c0_13, %c0_14], %23 {strides = array<i32>} : memref<8x128xf32, #tpu.memory_space<vmem>>, vector<8x128xf32>,
    return
  }
  func.func @transform_0(%arg0: i32) -> (i32, i32) {
    %c0_i32 = arith.constant 0 : i32
    %c0_i32_0 = arith.constant 0 : i32
    return %arg0, %c0_i32 : i32, i32
  }
  func.func @transform_1(%arg0: i32) -> (i32, i32) {
    %c0_i32 = arith.constant 0 : i32
    %c0_i32_0 = arith.constant 0 : i32
    %c0_i32_1 = arith.constant 0 : i32
    return %c0_i32, %c0_i32_0 : i32, i32
  }
  func.func @transform_2(%arg0: i32) -> (i32, i32) {
    %c0_i32 = arith.constant 0 : i32
    %c0_i32_0 = arith.constant 0 : i32
    %c0_i32_1 = arith.constant 0 : i32
    return %c0_i32, %c0_i32_0 : i32, i32
  }
  func.func @transform_3(%arg0: i32) -> (i32, i32) {
    %c0_i32 = arith.constant 0 : i32
    %c0_i32_0 = arith.constant 0 : i32
    %c0_i32_1 = arith.constant 0 : i32
    return %c0_i32, %c0_i32_0 : i32, i32
  }
  func.func @transform_4(%arg0: i32) -> (i32, i32) {
    %c0_i32 = arith.constant 0 : i32
    %c0_i32_0 = arith.constant 0 : i32
    %c0_i32_1 = arith.constant 0 : i32
    return %c0_i32, %c0_i32_0 : i32, i32
  }
  func.func @transform_5(%arg0: i32) -> (i32, i32) {
    %c0_i32 = arith.constant 0 : i32
    %c0_i32_0 = arith.constant 0 : i32
    return %arg0, %c0_i32 : i32, i32
  }
}

</mosaic_0001>

<llo_original>
// kernel: tpu_custom_call.1
$region0: #{tpu_custom_call.1}
  #allocation0 [shape = 'u32[]', space=smem, size = 0x4, offset = 0x4, fixed_abs, tag = 'smem constant byte address 0x4 - core index']
  #allocation1 [shape = 'u32[72,128]{1,0:T(1,128)}', space=vmem, size = 0x9000, scoped, tag = 'internal scratch']
  %s0 = inlined_call_operand.hbm [shape: bf16[8,16], index: 0, kind: input, shape index: {}]
  %s1 = inlined_call_operand.hbm [shape: bf16[16,128], index: 1, kind: input, shape index: {}]
  %s2 = inlined_call_operand.vmem [shape: f32[1,128], index: 2, kind: input, shape index: {}]
  %s3 = inlined_call_operand.hbm [shape: bf16[128,128], index: 3, kind: input, shape index: {}]
  %s4 = inlined_call_operand.vmem [shape: f32[1,128], index: 4, kind: input, shape index: {}]
  %s5 = inlined_call_operand.hbm [shape: f32[8,128], index: 5, kind: output, shape index: {}]
  %s6 = sld [smem:[#allocation0]]
  $region42: #{tpu_custom_call.1} parent=0
    _
  %s8 = ssub.s32 1, %s6
  %s9 = scalar_select 0, %s8, %s6
  $region1: #{tpu_custom_call.1} parent=0
    #allocation2 [shape = 'u8[2048]{0}', space=vmem, size = 0x800, scoped, tag = 'input window, operand 0, single buffered']
    #allocation3 [shape = 's32[1]{0}', space=sflag, size = 0x4, scoped, tag = 'scoped memory for tpu_custom_call.1']
    #allocation4 [shape = 's32[1]{0}', space=sflag, size = 0x4, scoped, tag = 'scoped memory for tpu_custom_call.1']
    #allocation5 [shape = 'u8[4096]{0}', space=vmem, size = 0x1000, scoped, tag = 'input window, operand 1, single buffered']
    #allocation6 [shape = 's32[1]{0}', space=sflag, size = 0x4, scoped, tag = 'scoped memory for tpu_custom_call.1']
    #allocation7 [shape = 'u8[32768]{0}', space=vmem, size = 0x8000, scoped, tag = 'input window, operand 3, single buffered']
    #allocation8 [shape = 'u8[4096]{0}', space=vmem, size = 0x1000, scoped, tag = 'output window, operand 0, single buffered']
    %10 = vsyncpa [#allocation3], 0
    %11 = vsyncpa [#allocation6], 0
    %12 = vsyncpa [#allocation4], 0
    // Predicated region
    $region2: #{tpu_custom_call.1} parent=1 // pred_check
      _
    $region3: #{tpu_custom_call.1} parent=1 // pred_check_branch
      %14 = sbr.rel (0) target = $region5
    $region4: #{tpu_custom_call.1} parent=1 // pred_region
      %16 = vsyncadd [#allocation3], 0
      %s18 = sshll.u32 %s0, 4
      %s19 = int_to_ptr.hbm [resolvable:$true] %s18
      %s20 = sshll.u32 [#allocation2], 4
      %s21 = int_to_ptr.vmem [resolvable:$true] %s20
      %23 = dma.hbm_to_vmem [thread:$0]  %s19, 64, %s21, [#allocation3]
    $region5: #{tpu_custom_call.1} parent=1 // pred_fallthru
      _
    // Predicated region
    $region6: #{tpu_custom_call.1} parent=1 // pred_check
      _
    $region7: #{tpu_custom_call.1} parent=1 // pred_check_branch
      %25 = sbr.rel (0) target = $region9
    $region8: #{tpu_custom_call.1} parent=1 // pred_region
      %27 = vsyncadd [#allocation6], 0
      %s28 = sshll.u32 %s1, 4
      %s29 = int_to_ptr.hbm [resolvable:$true] %s28
      %s30 = sshll.u32 [#allocation5], 4
      %s31 = int_to_ptr.vmem [resolvable:$true] %s30
      %36 = dma.hbm_to_vmem [thread:$0]  %s29, 128, %s31, [#allocation6], 64, 64, 4
    $region9: #{tpu_custom_call.1} parent=1 // pred_fallthru
      _
    // Predicated region
    $region10: #{tpu_custom_call.1} parent=1 // pred_check
      _
    $region11: #{tpu_custom_call.1} parent=1 // pred_check_branch
      %38 = sbr.rel (0) target = $region13
    $region12: #{tpu_custom_call.1} parent=1 // pred_region
      _
    $region13: #{tpu_custom_call.1} parent=1 // pred_fallthru
      _
    // Predicated region
    $region14: #{tpu_custom_call.1} parent=1 // pred_check
      _
    $region15: #{tpu_custom_call.1} parent=1 // pred_check_branch
      %40 = sbr.rel (0) target = $region17
    $region16: #{tpu_custom_call.1} parent=1 // pred_region
      %42 = vsyncadd [#allocation6], 0
      %s43 = sshll.u32 %s3, 4
      %s44 = int_to_ptr.hbm [resolvable:$true] %s43
      %s45 = sshll.u32 [#allocation7], 4
      %s46 = int_to_ptr.vmem [resolvable:$true] %s45
      %51 = dma.hbm_to_vmem [thread:$0]  %s44, 1024, %s46, [#allocation6], 64, 64, 4
    $region17: #{tpu_custom_call.1} parent=1 // pred_fallthru
      _
    // Predicated region
    $region18: #{tpu_custom_call.1} parent=1 // pred_check
      _
    $region19: #{tpu_custom_call.1} parent=1 // pred_check_branch
      %53 = sbr.rel (0) target = $region21
    $region20: #{tpu_custom_call.1} parent=1 // pred_region
      _
    $region21: #{tpu_custom_call.1} parent=1 // pred_fallthru
      _
    // Predicated region
    $region22: #{tpu_custom_call.1} parent=1 // pred_check
      _
    $region23: #{tpu_custom_call.1} parent=1 // pred_check_branch
      %55 = sbr.rel (0) target = $region25
    $region24: #{tpu_custom_call.1} parent=1 // pred_region
      %57 = dma.done [#allocation3], 64
    $region25: #{tpu_custom_call.1} parent=1 // pred_fallthru
      _
    // Predicated region
    $region26: #{tpu_custom_call.1} parent=1 // pred_check
      _
    $region27: #{tpu_custom_call.1} parent=1 // pred_check_branch
      %59 = sbr.rel (0) target = $region29
    $region28: #{tpu_custom_call.1} parent=1 // pred_region
      %61 = dma.done [#allocation6], 128
    $region29: #{tpu_custom_call.1} parent=1 // pred_fallthru
      _
    // Predicated region
    $region30: #{tpu_custom_call.1} parent=1 // pred_check
      _
    $region31: #{tpu_custom_call.1} parent=1 // pred_check_branch
      %63 = sbr.rel (0) target = $region33
    $region32: #{tpu_custom_call.1} parent=1 // pred_region
      %65 = dma.done [#allocation6], 1024
    $region33: #{tpu_custom_call.1} parent=1 // pred_fallthru
      _
    %v67 = vld [vmem:[#allocation2] sm:$0xf]
    %v68 = vld [vmem:[#allocation5] sm:$0xf]
    %v69 = vld [vmem:[#allocation5 + $0x4] sm:$0xf]
    %v70 = vld [vmem:[%s2] sm:$0x1]
    %v72 = vperm.slane %v70, 0
    %v76 = vunpack.c.l.b16 %v68
    %v77 = vunpack.c.l.b16 %v69
    %v78 = vpack.c.b16 %v77, %v76
    %vm80 = vcmask 130048
    %v82 = vsel %vm80, %v67, 0
    %84 = vmatpush.bf16.msra.mxu0 0
    %85 = vmatpush.bf16.msra.mxu0 0
    %86 = vmatpush.bf16.msra.mxu0 0
    %87 = vmatpush.bf16.msra.mxu0 0
    %88 = vmatpush.bf16.msra.mxu0 0
    %89 = vmatpush.bf16.msra.mxu0 0
    %90 = vmatpush.bf16.msra.mxu0 0
    %91 = vmatpush.bf16.msra.mxu0 %v78
    %92 = vmatmul.bf16.gmra.mxu0 %v82
    %v93 = vpop.f32.mrf.mxu0
    %v94 = vadd.f32 %v72, %v93
    %v95 = vpop.f32.mrf.mxu0
    %96 = vdwg.mxu0
    %v97 = vmax.f32 %v94, 0.0
    %v98 = vpack.c.bf16 %v97, %v97
    %v99 = vld [vmem:[#allocation7] sm:$0xf]
    %v100 = vld [vmem:[#allocation7 + $0x4] sm:$0xf]
    %v101 = vld [vmem:[#allocation7 + $0x8] sm:$0xf]
    %v102 = vld [vmem:[#allocation7 + $0xc] sm:$0xf]
    %v103 = vld [vmem:[#allocation7 + $0x10] sm:$0xf]
    %v104 = vld [vmem:[#allocation7 + $0x14] sm:$0xf]
    %v105 = vld [vmem:[#allocation7 + $0x18] sm:$0xf]
    %v106 = vld [vmem:[#allocation7 + $0x1c] sm:$0xf]
    %v107 = vld [vmem:[#allocation7 + $0x20] sm:$0xf]
    %v108 = vld [vmem:[#allocation7 + $0x24] sm:$0xf]
    %v109 = vld [vmem:[#allocation7 + $0x28] sm:$0xf]
    %v110 = vld [vmem:[#allocation7 + $0x2c] sm:$0xf]
    %v111 = vld [vmem:[#allocation7 + $0x30] sm:$0xf]
    %v112 = vld [vmem:[#allocation7 + $0x34] sm:$0xf]
    %v113 = vld [vmem:[#allocation7 + $0x38] sm:$0xf]
    %v114 = vld [vmem:[#allocation7 + $0x3c] sm:$0xf]
    %v115 = vld [vmem:[%s4] sm:$0x1]
    %v117 = vperm.slane %v115, 0
    %v135 = vunpack.c.l.b16 %v99
    %v136 = vunpack.c.l.b16 %v100
    %v137 = vunpack.c.l.b16 %v101
    %v138 = vunpack.c.l.b16 %v102
    %v139 = vunpack.c.l.b16 %v103
    %v140 = vunpack.c.l.b16 %v104
    %v141 = vunpack.c.l.b16 %v105
    %v142 = vunpack.c.l.b16 %v106
    %v143 = vunpack.c.l.b16 %v107
    %v144 = vunpack.c.l.b16 %v108
    %v145 = vunpack.c.l.b16 %v109
    %v146 = vunpack.c.l.b16 %v110
    %v147 = vunpack.c.l.b16 %v111
    %v148 = vunpack.c.l.b16 %v112
    %v149 = vunpack.c.l.b16 %v113
    %v150 = vunpack.c.l.b16 %v114
    %v151 = vpack.c.b16 %v136, %v135
    %v152 = vpack.c.b16 %v138, %v137
    %v153 = vpack.c.b16 %v140, %v139
    %v154 = vpack.c.b16 %v142, %v141
    %v155 = vpack.c.b16 %v144, %v143
    %v156 = vpack.c.b16 %v146, %v145
    %v157 = vpack.c.b16 %v148, %v147
    %v158 = vpack.c.b16 %v150, %v149
    %167 = vmatpush.bf16.msra.mxu0 %v158
    %168 = vmatpush.bf16.msra.mxu0 %v157
    %169 = vmatpush.bf16.msra.mxu0 %v156
    %170 = vmatpush.bf16.msra.mxu0 %v155
    %171 = vmatpush.bf16.msra.mxu0 %v154
    %172 = vmatpush.bf16.msra.mxu0 %v153
    %173 = vmatpush.bf16.msra.mxu0 %v152
    %174 = vmatpush.bf16.msra.mxu0 %v151
    %175 = vmatmul.bf16.gmra.mxu0 %v98
    %v176 = vpop.f32.mrf.mxu0
    %v177 = vadd.f32 %v117, %v176
    %v178 = vpop.f32.mrf.mxu0
    %179 = vdwg.mxu0
    %180 = vmax.xlane.f32.xlu0 %v177
    %v181 = vpop.xlane.xlu0 %180
    %v182 = vsub.f32 %v177, %v181
    %v183 = vmul.f32 %v182, 1.442695
    %v184 = vpow.pop %v183
    %185 = vadd.xlane.f32.xlu0 %v184
    %v186 = vpop.xlane.xlu0 %185
    %v187 = vrcp.pop %v186
    %v188 = vmul.f32 %v186, %v187
    %v189 = vsub.f32 1.0, %v188
    %v190 = vmul.f32 %v187, %v189
    %v191 = vadd.f32 %v187, %v190
    %vm192 = vweird.f32 %v186
    %vm193 = vweird.f32 %v187
    %vm194 = vmor %vm192, %vm193
    %v195 = vsel %vm194, %v187, %v191
    %v196 = vand.u32 2147483647, %v186
    %vm197 = vcmp.eq.f32.partialorder %v196, 8.507059e+37
    %v198 = vand.u32 %v186, 2147483648
    %v199 = vor.u32 1.1754944e-38, %v198
    %v200 = vsel %vm197, %v199, %v195
    %v201 = vmul.f32 %v184, %v200
    %202 = vst [vmem:[#allocation8] sm:$0xff] %v201
    // Predicated region
    $region34: #{tpu_custom_call.1} parent=1 // pred_check
      _
    $region35: #{tpu_custom_call.1} parent=1 // pred_check_branch
      %204 = sbr.rel (0) target = $region37
    $region36: #{tpu_custom_call.1} parent=1 // pred_region
      %206 = vsyncadd [#allocation4], 0
      %s208 = sshll.u32 [#allocation8], 4
      %s209 = int_to_ptr.vmem [resolvable:$true] %s208
      %s210 = sshll.u32 %s5, 4
      %s211 = int_to_ptr.hbm [resolvable:$true] %s210
      %213 = dma.vmem_to_hbm [thread:$0]  %s209, 128, %s211, [#allocation4]
    $region37: #{tpu_custom_call.1} parent=1 // pred_fallthru
      _
    // Predicated region
    $region38: #{tpu_custom_call.1} parent=1 // pred_check
      _
    $region39: #{tpu_custom_call.1} parent=1 // pred_check_branch
      %215 = sbr.rel (0) target = $region41
    $region40: #{tpu_custom_call.1} parent=1 // pred_region
      %217 = dma.done [#allocation4], 128
    $region41: #{tpu_custom_call.1} parent=1 // pred_fallthru
      _
    %218 = vsyncpa [#allocation3], 1
    %219 = vsyncpa [#allocation6], 1
    %220 = vsyncpa [#allocation4], 1

</llo_original>
